<compile_context>
chip_gen: v7x
topology: tpu7x:2x2x1
jax: 0.10.0
libtpu: 0.0.40
codegen_flags: <defaults>
</compile_context>

<pallas_src>
import jax
import jax.numpy as jnp
import numpy as np
from jax.experimental import pallas as pl
from jax.experimental.pallas import tpu as pltpu


def _round_up(x, m):
    return ((x + m - 1) // m) * m


def _vmem_limits():
    """(vmem_limit_bytes, tile_budget_bytes) — conservative unless v5e/v6e."""
    kind = ""
    try:
        kind = jax.devices()[0].device_kind.lower()
    except Exception:
        pass
    if ("v5" in kind) or ("v6" in kind):        # 128 MiB physical VMEM parts
        return 96 << 20, 72 << 20
    return 48 << 20, 36 << 20                    # safe on v7x (64 MiB/TC) / unknown


def _vibo_encode_kernel(x_ref, wx_ref, wbf_ref, bias_ref, out_ref):
    """Fused NaN-mask + X @ Wx + mask @ (b*Wb) + bias for one student tile.

    x_ref    : [TN, I]     f32 raw responses (NaN = missing)
    wx_ref   : [I, C_pad]  f32 weight rows acting on X
    wbf_ref  : [I, C_pad]  f32 weight rows acting on B, pre-scaled by b
    bias_ref : [1, C_pad]  f32 bias (mean part)
    out_ref  : [TN, C_pad] f32 abilities (mean part)
    """
    x = x_ref[...]
    nanmask = jnp.isnan(x)
    x_clean = jnp.where(nanmask, 0.0, x)
    mask = jnp.where(nanmask, 0.0, 1.0).astype(jnp.float32)   # answered indicator

    z = jnp.dot(x_clean, wx_ref[...], preferred_element_type=jnp.float32)
    z = z + jnp.dot(mask, wbf_ref[...], preferred_element_type=jnp.float32)
    z = z + bias_ref[...]                                     # [1, C_pad] broadcast
    out_ref[...] = z.astype(out_ref.dtype)


def prepare_vibo_params(q_b_weight, q_theta_weight, q_theta_bias,
                        num_items, num_concepts):
    """One-time parameter preprocessing (hoisted out of the per-call path)."""
    I, C = num_items, num_concepts
    C_pad = _round_up(C, 8)

    # torch Linear: y = x @ W.T + bias; W is [2C, 2I].  Transpose to [2I, 2C],
    # keep only the first C output columns (mean part), split the input dim
    # into the X half and the B half, and fold b into the B half.
    W = jnp.asarray(q_theta_weight, jnp.float32).T            # [2I, 2C]
    Wx = W[:I, :C]                                            # [I, C]
    Wb = W[I:, :C]                                            # [I, C]
    b = jnp.asarray(q_b_weight, jnp.float32)[:, 0:1]          # [I, 1]
    Wb_fold = b * Wb                                          # [I, C]
    bias = jnp.asarray(q_theta_bias, jnp.float32)[:C]

    pad = C_pad - C
    Wx_p = jnp.pad(Wx, ((0, 0), (0, pad)))
    Wbf_p = jnp.pad(Wb_fold, ((0, 0), (0, pad)))
    bias_p = jnp.pad(bias, (0, pad)).reshape(1, C_pad)
    return Wx_p, Wbf_p, bias_p


def _pick_tile_n(N, I, C_pad, tile_budget):
    """Largest student tile such that streamed + resident buffers fit VMEM."""
    # Weights/bias are double-buffered by Pallas even with a constant index_map.
    weights = 2 * (2 * I * C_pad * 4 + C_pad * 4)
    n_cap = max(8, _round_up(N, 8))                 # never tile wider than N
    # Keep >= ~4 grid steps so the "parallel" axis can feed both TCs (v7x).
    par_cap = max(8, _round_up(pl.cdiv(N, 4), 8))
    for tn in (8192, 4096, 2048, 1024, 512, 256, 128, 64, 32, 16, 8):
        if tn > n_cap or tn > par_cap:
            continue
        x_bytes = 2 * tn * I * 4                    # double-buffered f32 X tile
        out_bytes = 2 * tn * C_pad * 4              # double-buffered f32 out tile
        if weights + x_bytes + out_bytes <= tile_budget:
            return tn
    return 8


def vibo_encode(X, Wx_p, Wbf_p, bias_p, num_concepts):
    """VIBO.encode forward: X [N, I] (NaN = missing) -> Theta [N, C]."""
    X = jnp.asarray(X, jnp.float32)                 # no-op if already f32
    N, I = X.shape
    C_pad = Wx_p.shape[1]

    vmem_limit, tile_budget = _vmem_limits()
    TN = _pick_tile_n(N, I, C_pad, tile_budget)
    grid_n = pl.cdiv(N, TN)                         # ragged last tile allowed

    out = pl.pallas_call(
        _vibo_encode_kernel,
        out_shape=jax.ShapeDtypeStruct((N, C_pad), jnp.float32),
        grid_spec=pltpu.PrefetchScalarGridSpec(
            num_scalar_prefetch=0,
            grid=(grid_n,),
            in_specs=[
                pl.BlockSpec((TN, I), lambda i: (i, 0)),      # streamed X tile
                pl.BlockSpec((I, C_pad), lambda i: (0, 0)),   # resident weights
                pl.BlockSpec((I, C_pad), lambda i: (0, 0)),
                pl.BlockSpec((1, C_pad), lambda i: (0, 0)),
            ],
            out_specs=pl.BlockSpec((TN, C_pad), lambda i: (i, 0)),
        ),
        compiler_params=pltpu.CompilerParams(
            dimension_semantics=("parallel",),
            vmem_limit_bytes=vmem_limit,
        ),
    )(X, Wx_p, Wbf_p, bias_p)

    if C_pad != num_concepts:
        out = out[:, :num_concepts]
    return out


def _reference_encode(X, q_b_weight, q_theta_weight, q_theta_bias, num_concepts):
    """Plain-JAX reference mirroring the PyTorch code path."""
    X = jnp.asarray(X, jnp.float32)
    b = q_b_weight[:, 0]
    B = jnp.broadcast_to(b[None, :], X.shape)
    nanmask = jnp.isnan(X)
    B = jnp.where(nanmask, 0.0, B)
    Xc = jnp.where(nanmask, 0.0, X)
    inp = jnp.concatenate([Xc, B], axis=1)                    # [N, 2I]
    out = inp @ q_theta_weight.T + q_theta_bias               # [N, 2C]
    return out[:, :num_concepts]


if __name__ == "__main__":
    num_items = 16
    num_concepts = 4
    num_students = 20          # not a multiple of the tile -> exercises ragged tile

    key = jax.random.PRNGKey(0)
    k_emb, k_w, k_b, k_x, k_nan = jax.random.split(key, 5)

    # Deterministic parameter init (shapes from VIBO.__init__, num_hidden=0):
    #   q_b     : Embedding(num_items, 2)             -> N(0, 1)
    #   q_theta : Linear(2*num_items, 2*num_concepts) -> U(-1/sqrt(fan_in), +)
    q_b_weight = jax.random.normal(k_emb, (num_items, 2), dtype=jnp.float32)
    fan_in = 2 * num_items
    bound = 1.0 / np.sqrt(fan_in)
    q_theta_weight = jax.random.uniform(
        k_w, (2 * num_concepts, 2 * num_items),
        minval=-bound, maxval=bound, dtype=jnp.float32)
    q_theta_bias = jax.random.uniform(
        k_b, (2 * num_concepts,), minval=-bound, maxval=bound, dtype=jnp.float32)

    # Binary responses with some NaNs (missing answers).
    X = jax.random.bernoulli(k_x, 0.6, (num_students, num_items)).astype(jnp.float32)
    nan_mask = jax.random.bernoulli(k_nan, 0.15, (num_students, num_items))
    X = jnp.where(nan_mask, jnp.nan, X)

    # One-time parameter preprocessing (done at load time, not per forward).
    Wx_p, Wbf_p, bias_p = prepare_vibo_params(
        q_b_weight, q_theta_weight, q_theta_bias, num_items, num_concepts)

    theta = vibo_encode(X, Wx_p, Wbf_p, bias_p, num_concepts)
    theta = jax.block_until_ready(theta)

    theta_ref = _reference_encode(X, q_b_weight, q_theta_weight, q_theta_bias,
                                  num_concepts)
    np.testing.assert_allclose(np.asarray(theta), np.asarray(theta_ref),
                               rtol=1e-5, atol=1e-5)
    print("KERNEL_OK")
</pallas_src>

<mosaic_0001>
module attributes {stable_mosaic.version = 11 : i64} {
  func.func @_vibo_encode_kernel(%arg0: i32, %arg1: memref<8x16xf32, #tpu.memory_space<vmem>>, %arg2: memref<16x8xf32, #tpu.memory_space<vmem>>, %arg3: memref<16x8xf32, #tpu.memory_space<vmem>>, %arg4: memref<1x8xf32, #tpu.memory_space<vmem>>, %arg5: memref<8x8xf32, #tpu.memory_space<vmem>>) attributes {dimension_semantics = [#tpu.dimension_semantics<parallel>], iteration_bounds = array<i64: 3>, scalar_prefetch = 0 : i64, scratch_operands = 0 : i64, tpu.core_type = #tpu.core_type<tc>, window_params = [{transform_indices = @transform_0, window_bounds = array<i64: 8, 16>}, {pipeline_mode = #tpu.pipeline_mode<synchronous>, transform_indices = @transform_1, window_bounds = array<i64: 16, 8>}, {pipeline_mode = #tpu.pipeline_mode<synchronous>, transform_indices = @transform_2, window_bounds = array<i64: 16, 8>}, {pipeline_mode = #tpu.pipeline_mode<synchronous>, transform_indices = @transform_3, window_bounds = array<i64: 1, 8>}, {transform_indices = @transform_4, window_bounds = array<i64: 8, 8>}]} {
    %c0 = arith.constant 0 : index
    %c0_0 = arith.constant 0 : index
    %0 = vector.load %arg1[%c0, %c0_0] : memref<8x16xf32, #tpu.memory_space<vmem>>, vector<8x16xf32>
    %1 = arith.cmpf one, %0, %0 : vector<8x16xf32>
    %cst = arith.constant 0.000000e+00 : f32
    %2 = vector.broadcast %cst : f32 to vector<8x16xf32>
    %3 = arith.select %1, %2, %0 : vector<8x16xi1>, vector<8x16xf32>
    %cst_1 = arith.constant 0.000000e+00 : f32
    %cst_2 = arith.constant 1.000000e+00 : f32
    %4 = vector.broadcast %cst_1 : f32 to vector<8x16xf32>
    %5 = vector.broadcast %cst_2 : f32 to vector<8x16xf32>
    %6 = arith.select %1, %4, %5 : vector<8x16xi1>, vector<8x16xf32>
    %c0_3 = arith.constant 0 : index
    %c0_4 = arith.constant 0 : index
    %7 = vector.load %arg2[%c0_3, %c0_4] : memref<16x8xf32, #tpu.memory_space<vmem>>, vector<16x8xf32>
    %cst_5 = arith.constant dense<0.000000e+00> : vector<8x8xf32>
    %8 = tpu.matmul %3, %7, %cst_5 {dimension_numbers = #tpu.dot_dimension_numbers<[1], [0], [0], [1], [0, 0, 1, 1], [], []>} : vector<8x16xf32>, vector<16x8xf32>, vector<8x8xf32> -> vector<8x8xf32>
    %c0_6 = arith.constant 0 : index
    %c0_7 = arith.constant 0 : index
    %9 = vector.load %arg3[%c0_6, %c0_7] : memref<16x8xf32, #tpu.memory_space<vmem>>, vector<16x8xf32>
    %cst_8 = arith.constant dense<0.000000e+00> : vector<8x8xf32>
    %10 = tpu.matmul %6, %9, %cst_8 {dimension_numbers = #tpu.dot_dimension_numbers<[1], [0], [0], [1], [0, 0, 1, 1], [], []>} : vector<8x16xf32>, vector<16x8xf32>, vector<8x8xf32> -> vector<8x8xf32>
    %11 = arith.addf %8, %10 : vector<8x8xf32>
    %c0_9 = arith.constant 0 : index
    %c0_10 = arith.constant 0 : index
    %12 = vector.load %arg4[%c0_9, %c0_10] : memref<1x8xf32, #tpu.memory_space<vmem>>, vector<1x8xf32>
    %13 = vector.broadcast %12 : vector<1x8xf32> to vector<8x8xf32>
    %14 = arith.addf %11, %13 : vector<8x8xf32>
    %c0_11 = arith.constant 0 : index
    %c0_12 = arith.constant 0 : index
    %15 = vector.load %arg5[%c0_11, %c0_12] : memref<8x8xf32, #tpu.memory_space<vmem>>, vector<8x8xf32>
    tpu.vector_store %arg5[%c0_11, %c0_12], %14 {strides = array<i32>} : memref<8x8xf32, #tpu.memory_space<vmem>>, vector<8x8xf32>,
    return
  }
  func.func @transform_0(%arg0: i32) -> (i32, i32) {
    %c0_i32 = arith.constant 0 : i32
    %c0_i32_0 = arith.constant 0 : i32
    return %arg0, %c0_i32 : i32, i32
  }
  func.func @transform_1(%arg0: i32) -> (i32, i32) {
    %c0_i32 = arith.constant 0 : i32
    %c0_i32_0 = arith.constant 0 : i32
    %c0_i32_1 = arith.constant 0 : i32
    return %c0_i32, %c0_i32_0 : i32, i32
  }
  func.func @transform_2(%arg0: i32) -> (i32, i32) {
    %c0_i32 = arith.constant 0 : i32
    %c0_i32_0 = arith.constant 0 : i32
    %c0_i32_1 = arith.constant 0 : i32
    return %c0_i32, %c0_i32_0 : i32, i32
  }
  func.func @transform_3(%arg0: i32) -> (i32, i32) {
    %c0_i32 = arith.constant 0 : i32
    %c0_i32_0 = arith.constant 0 : i32
    %c0_i32_1 = arith.constant 0 : i32
    return %c0_i32, %c0_i32_0 : i32, i32
  }
  func.func @transform_4(%arg0: i32) -> (i32, i32) {
    %c0_i32 = arith.constant 0 : i32
    %c0_i32_0 = arith.constant 0 : i32
    return %arg0, %c0_i32 : i32, i32
  }
}

</mosaic_0001>

<llo_original>
// kernel: tpu_custom_call.1
$region0: #{tpu_custom_call.1}
  #allocation0 [shape = 'u32[]', space=smem, size = 0x4, offset = 0x4, fixed_abs, tag = 'smem constant byte address 0x4 - core index']
  #allocation1 [shape = 'u32[144,128]{1,0:T(1,128)}', space=vmem, size = 0x12000, scoped, tag = 'internal scratch']
  %s0 = inlined_call_operand.vmem [shape: f32[20,16], index: 0, kind: input, shape index: {}]
  %s1 = inlined_call_operand.vmem [shape: f32[16,8], index: 1, kind: input, shape index: {}]
  %s2 = inlined_call_operand.vmem [shape: f32[16,8], index: 2, kind: input, shape index: {}]
  %s3 = inlined_call_operand.vmem [shape: f32[1,8], index: 3, kind: input, shape index: {}]
  %s4 = inlined_call_operand.vmem [shape: f32[20,8], index: 4, kind: output, shape index: {}]
  %s5 = sld [smem:[#allocation0]]
  $region49: #{tpu_custom_call.1} parent=0
    _
  %s7 = ssub.s32 1, %s5
  %s8 = scalar_select 0, %s7, %s5
  loop: start=0, step=1, limit=5
  $region2: #{tpu_custom_call.1} parent=0 // loop_pre_header
    _
  $region3: #{tpu_custom_call.1} parent=0 // loop_header
    %s10 = sphi 0, %s14
    %p11 = scmp.ge.s32.totalorder %s10, 5
    %s20 = sphi 0, %s22
    %s23 = sphi 0, %s20
    %s24 = sphi 0, %s23
    %s40 = sphi 0, %s24
    %s44 = sphi 0, %s44
    %s46 = sphi 0, %s44
    %s47 = sphi 0, %s46
    %s61 = sphi 0, %s47
    %s65 = sphi 0, %s65
    %s67 = sphi 0, %s65
    %s68 = sphi 0, %s67
    %s82 = sphi 0, %s68
    %s86 = sphi 0, %s86
    %s88 = sphi 0, %s86
    %s89 = sphi 0, %s88
    %s103 = sphi 0, %s89
    %s109 = sphi 0, %s111
    %s112 = sphi 0, %s109
    %s113 = sphi 0, %s112
    %s129 = sphi 0, %s113
  $region4: #{tpu_custom_call.1} parent=0 // loop_header_branch
    %13 = sbr.rel (%p11) target = $region8
  $region5: #{tpu_custom_call.1} parent=0 // loop_body
    %s15 = ssub.s32 %s10, 1
    %s16 = ssub.s32 %s10, 2
    %s17 = sadd.s32 %s10, 1
    %s18 = ssub.s32 %s10, %s17
    %p19 = scmp.eq.s32.totalorder %s18, 0
    %s21 = sadd.s32 %s20, 1
    %s22 = scalar_select %p19, %s20, %s21
    %p25 = pneg %p19
    %p26 = scmp.eq.s32.totalorder %s10, 2
    %p27 = por %p25, %p26
    %p28 = scmp.ne.s32.totalorder %s20, %s23
    %p29 = scmp.eq.s32.totalorder %s10, 0
    %p30 = por %p28, %p29
    %p31 = scmp.ne.s32.totalorder %s20, %s23
    %p32 = scmp.eq.s32.totalorder %s15, 2
    %p33 = por %p31, %p32
    %p34 = scmp.ne.s32.totalorder %s23, %s24
    %p35 = scmp.eq.s32.totalorder %s15, 0
    %p36 = por %p34, %p35
    %p37 = scmp.ne.s32.totalorder %s23, %s24
    %p38 = scmp.eq.s32.totalorder %s16, 2
    %p39 = por %p37, %p38
    %p41 = scmp.ne.s32.totalorder %s24, %s40
    %p42 = scmp.eq.s32.totalorder %s16, 0
    %p43 = por %p41, %p42
    %s45 = sadd.s32 %s44, 1
    %p48 = scmp.eq.s32.totalorder %s10, 2
    %p49 = scmp.ne.s32.totalorder %s44, %s46
    %p50 = scmp.eq.s32.totalorder %s10, 0
    %p51 = por %p49, %p50
    %p52 = scmp.ne.s32.totalorder %s44, %s46
    %p53 = scmp.eq.s32.totalorder %s15, 2
    %p54 = por %p52, %p53
    %p55 = scmp.ne.s32.totalorder %s46, %s47
    %p56 = scmp.eq.s32.totalorder %s15, 0
    %p57 = por %p55, %p56
    %p58 = scmp.ne.s32.totalorder %s46, %s47
    %p59 = scmp.eq.s32.totalorder %s16, 2
    %p60 = por %p58, %p59
    %p62 = scmp.ne.s32.totalorder %s47, %s61
    %p63 = scmp.eq.s32.totalorder %s16, 0
    %p64 = por %p62, %p63
    %s66 = sadd.s32 %s65, 1
    %p69 = scmp.eq.s32.totalorder %s10, 2
    %p70 = scmp.ne.s32.totalorder %s65, %s67
    %p71 = scmp.eq.s32.totalorder %s10, 0
    %p72 = por %p70, %p71
    %p73 = scmp.ne.s32.totalorder %s65, %s67
    %p74 = scmp.eq.s32.totalorder %s15, 2
    %p75 = por %p73, %p74
    %p76 = scmp.ne.s32.totalorder %s67, %s68
    %p77 = scmp.eq.s32.totalorder %s15, 0
    %p78 = por %p76, %p77
    %p79 = scmp.ne.s32.totalorder %s67, %s68
    %p80 = scmp.eq.s32.totalorder %s16, 2
    %p81 = por %p79, %p80
    %p83 = scmp.ne.s32.totalorder %s68, %s82
    %p84 = scmp.eq.s32.totalorder %s16, 0
    %p85 = por %p83, %p84
    %s87 = sadd.s32 %s86, 1
    %p90 = scmp.eq.s32.totalorder %s10, 2
    %p91 = scmp.ne.s32.totalorder %s86, %s88
    %p92 = scmp.eq.s32.totalorder %s10, 0
    %p93 = por %p91, %p92
    %p94 = scmp.ne.s32.totalorder %s86, %s88
    %p95 = scmp.eq.s32.totalorder %s15, 2
    %p96 = por %p94, %p95
    %p97 = scmp.ne.s32.totalorder %s88, %s89
    %p98 = scmp.eq.s32.totalorder %s15, 0
    %p99 = por %p97, %p98
    %p100 = scmp.ne.s32.totalorder %s88, %s89
    %p101 = scmp.eq.s32.totalorder %s16, 2
    %p102 = por %p100, %p101
    %p104 = scmp.ne.s32.totalorder %s89, %s103
    %p105 = scmp.eq.s32.totalorder %s16, 0
    %p106 = por %p104, %p105
    %s107 = ssub.s32 %s10, %s17
    %p108 = scmp.eq.s32.totalorder %s107, 0
    %s110 = sadd.s32 %s109, 1
    %s111 = scalar_select %p108, %s109, %s110
    %p114 = pneg %p108
    %p115 = scmp.eq.s32.totalorder %s10, 2
    %p116 = por %p114, %p115
    %p117 = scmp.ne.s32.totalorder %s109, %s112
    %p118 = scmp.eq.s32.totalorder %s10, 0
    %p119 = por %p117, %p118
    %p120 = scmp.ne.s32.totalorder %s109, %s112
    %p121 = scmp.eq.s32.totalorder %s15, 2
    %p122 = por %p120, %p121
    %p123 = scmp.ne.s32.totalorder %s112, %s113
    %p124 = scmp.eq.s32.totalorder %s15, 0
    %p125 = por %p123, %p124
    %p126 = scmp.ne.s32.totalorder %s112, %s113
    %p127 = scmp.eq.s32.totalorder %s16, 2
    %p128 = por %p126, %p127
    %p130 = scmp.ne.s32.totalorder %s113, %s129
    %p131 = scmp.eq.s32.totalorder %s16, 0
    %p132 = por %p130, %p131
    %p133 = scmp.le.s32.totalorder 1, %s10
    %p134 = scmp.lt.s32.totalorder %s10, 4
    %p135 = pnand %p133, %p134
    %p136 = pneg %p135
    // Predicated region
    $region9: #{tpu_custom_call.1} parent=5 // pred_check
      _
    $region10: #{tpu_custom_call.1} parent=5 // pred_check_branch
      %138 = sbr.rel (%p135) target = $region12
    $region11: #{tpu_custom_call.1} parent=5 // pred_region
      %s139 = ssub.s32 %s10, 1
      // Predicated region
      $region13: #{tpu_custom_call.1} parent=11 // pred_check
        %p140 = pneg %p57
      $region14: #{tpu_custom_call.1} parent=11 // pred_check_branch
        %142 = sbr.rel (%p140) target = $region16
      $region15: #{tpu_custom_call.1} parent=11 // pred_region
        _
      $region16: #{tpu_custom_call.1} parent=11 // pred_fallthru
        _
      // Predicated region
      $region17: #{tpu_custom_call.1} parent=11 // pred_check
        %p143 = pneg %p78
      $region18: #{tpu_custom_call.1} parent=11 // pred_check_branch
        %145 = sbr.rel (%p143) target = $region20
      $region19: #{tpu_custom_call.1} parent=11 // pred_region
        _
      $region20: #{tpu_custom_call.1} parent=11 // pred_fallthru
        _
      // Predicated region
      $region21: #{tpu_custom_call.1} parent=11 // pred_check
        %p146 = pneg %p99
      $region22: #{tpu_custom_call.1} parent=11 // pred_check_branch
        %148 = sbr.rel (%p146) target = $region24
      $region23: #{tpu_custom_call.1} parent=11 // pred_region
        _
      $region24: #{tpu_custom_call.1} parent=11 // pred_fallthru
        _
    $region12: #{tpu_custom_call.1} parent=5 // pred_fallthru
      _
    %p149 = scmp.lt.s32.totalorder %s10, 3
    // Predicated region
    $region25: #{tpu_custom_call.1} parent=5 // pred_check
      %p150 = pneg %p149
    $region26: #{tpu_custom_call.1} parent=5 // pred_check_branch
      %152 = sbr.rel (%p150) target = $region28
    $region27: #{tpu_custom_call.1} parent=5 // pred_region
      // Predicated region
      $region29: #{tpu_custom_call.1} parent=27 // pred_check
        %p153 = pneg %p30
      $region30: #{tpu_custom_call.1} parent=27 // pred_check_branch
        %155 = sbr.rel (%p153) target = $region32
      $region31: #{tpu_custom_call.1} parent=27 // pred_region
        %p156 = scmp.lt.s32.totalorder %s10, 2
        %s157 = scalar_select %p156, %s10, 2
        %s158 = smul.addr %s157, 8
        %s159 = scalar_lea.vmem %s0, %s158
      $region32: #{tpu_custom_call.1} parent=27 // pred_fallthru
        _
    $region28: #{tpu_custom_call.1} parent=5 // pred_fallthru
      _
    %p160 = scmp.le.s32.totalorder 1, %s10
    %p161 = scmp.lt.s32.totalorder %s10, 4
    %p162 = pnand %p160, %p161
    %p163 = pneg %p162
    // Predicated region
    $region33: #{tpu_custom_call.1} parent=5 // pred_check
      _
    $region34: #{tpu_custom_call.1} parent=5 // pred_check_branch
      %165 = sbr.rel (%p162) target = $region36
    $region35: #{tpu_custom_call.1} parent=5 // pred_region
      %s166 = ssub.s32 %s10, 1
      %p167 = scmp.lt.s32.totalorder %s15, 2
      %s168 = scalar_select %p167, %s15, 2
      %s169 = smul.addr %s168, 8
      %s170 = scalar_lea.vmem %s0, %s169
      %p171 = pneg %p36
      %p172 = pneg %p33
      %p173 = pneg %p57
      %p174 = pneg %p54
      %p175 = pneg %p78
      %p176 = pneg %p75
      %p177 = pneg %p99
      %p178 = pneg %p96
      %p179 = pneg %p125
      %p180 = pneg %p122
      %p181 = scmp.lt.s32.totalorder %s15, 2
      %s182 = scalar_select %p181, %s15, 2
      %s183 = smul.addr %s182, 8
      %s184 = scalar_lea.vmem %s4, %s183
      %p185 = scmp.lt.s32.totalorder %s15, 2
      %s186 = scalar_select %p185, %s15, 2
      %s187 = smul.addr %s186, 8
      %s188 = scalar_lea.vmem %s0, %s187
      %p189 = scmp.lt.s32.totalorder %s15, 2
      %s190 = scalar_select %p189, %s15, 2
      %s191 = smul.addr %s190, 8
      %s192 = scalar_lea.vmem %s4, %s191
      %v193 = vld [vmem:[%s188] sm:$0xff]
      %vm194 = vcmp.ne.f32.partialorder %v193, %v193
      %v195 = vsel %vm194, 0.0, %v193
      %v196 = vsel %vm194, 0.0, 1.0
      %v197 = vld [vmem:[%s1] sm:$0xff]
      %v198 = vld [vmem:[%s1 + $0x8] sm:$0xff]
      %v199 = vld [vmem:[%s2] sm:$0xff]
      %v200 = vld [vmem:[%s2 + $0x8] sm:$0xff]
      %vm201 = vcmask 130048
      %v203 = vsel %vm201, %v196, 0
      %205 = vmatprep.subr.mxu0 0.0
      %206 = vmatpush1.msra.mxu0 %v199
      %207 = vmatprep.subr.mxu0 0.0
      %208 = vmatpush1.msra.mxu0 %v200
      %209 = vmatprep.subr.mxu0 0.0
      %210 = vmatpush1.msra.mxu0 0.0
      %211 = vmatprep.subr.mxu0 0.0
      %212 = vmatpush1.msra.mxu0 0.0
      %213 = vmatprep.subr.mxu0 0.0
      %214 = vmatpush1.msra.mxu0 0.0
      %215 = vmatprep.subr.mxu0 0.0
      %216 = vmatpush1.msra.mxu0 0.0
      %217 = vmatprep.subr.mxu0 0.0
      %218 = vmatpush1.msra.mxu0 0.0
      %219 = vmatprep.subr.mxu0 0.0
      %220 = vmatpush1.msra.mxu0 0.0
      %221 = vmatprep.subr.mxu0 0.0
      %222 = vmatpush1.msra.mxu0 0.0
      %223 = vmatprep.subr.mxu0 0.0
      %224 = vmatpush1.msra.mxu0 0.0
      %225 = vmatprep.subr.mxu0 0.0
      %226 = vmatpush1.msra.mxu0 0.0
      %227 = vmatprep.subr.mxu0 0.0
      %228 = vmatpush1.msra.mxu0 0.0
      %229 = vmatprep.subr.mxu0 0.0
      %230 = vmatpush1.msra.mxu0 0.0
      %231 = vmatprep.subr.mxu0 0.0
      %232 = vmatpush1.msra.mxu0 0.0
      %233 = vmatprep.subr.mxu0 0.0
      %234 = vmatpush1.msra.mxu0 0.0
      %235 = vmatprep.subr.mxu0 0.0
      %236 = vmatpush1.msra.mxu0 0.0
      %237 = vmatprep.subr.mxu0 0.0
      %238 = vmatpush1.msra.mxu0 0.0
      %239 = vmatprep.subr.mxu0 0.0
      %240 = vmatpush1.msra.mxu0 0.0
      %241 = vmatprep.subr.mxu0 0.0
      %242 = vmatpush1.msra.mxu0 0.0
      %243 = vmatprep.subr.mxu0 0.0
      %244 = vmatpush1.msra.mxu0 0.0
      %245 = vmatprep.subr.mxu0 0.0
      %246 = vmatpush1.msra.mxu0 0.0
      %247 = vmatprep.subr.mxu0 0.0
      %248 = vmatpush1.msra.mxu0 0.0
      %249 = vmatprep.subr.mxu0 0.0
      %250 = vmatpush1.msra.mxu0 0.0
      %251 = vmatprep.subr.mxu0 0.0
      %252 = vmatpush1.msra.mxu0 0.0
      %253 = vmatprep.subr.mxu0 0.0
      %254 = vmatpush1.msra.mxu0 0.0
      %255 = vmatprep.subr.mxu0 0.0
      %256 = vmatpush1.msra.mxu0 0.0
      %257 = vmatprep.subr.mxu0 0.0
      %258 = vmatpush1.msra.mxu0 0.0
      %259 = vmatprep.subr.mxu0 0.0
      %260 = vmatpush1.msra.mxu0 0.0
      %261 = vmatprep.subr.mxu0 0.0
      %262 = vmatpush1.msra.mxu0 0.0
      %263 = vmatprep.subr.mxu0 0.0
      %264 = vmatpush1.msra.mxu0 0.0
      %265 = vmatprep.subr.mxu0 0.0
      %266 = vmatpush1.msra.mxu0 0.0
      %267 = vmatprep.subr.mxu0 0.0
      %268 = vmatpush1.msra.mxu0 0.0
      %269 = vmatprep.mubr.f32.mxu0 0.0
      %270 = vmatmul.mubr.f32.gmra.mrb[0].mxu0 %v203
      %v271 = vpop.f32.mrb[0].mxu0
      %v272 = vadd.f32 0.0, %v271
      %v273 = vpop.f32.mrb[0].mxu0
      %274 = vdwg.mxu0
      %v276 = vsel %vm201, %v195, 0
      %278 = vmatprep.subr.mxu0 0.0
      %279 = vmatpush1.msra.mxu0 %v197
      %280 = vmatprep.subr.mxu0 0.0
      %281 = vmatpush1.msra.mxu0 %v198
      %282 = vmatprep.subr.mxu0 0.0
      %283 = vmatpush1.msra.mxu0 0.0
      %284 = vmatprep.subr.mxu0 0.0
      %285 = vmatpush1.msra.mxu0 0.0
      %286 = vmatprep.subr.mxu0 0.0
      %287 = vmatpush1.msra.mxu0 0.0
      %288 = vmatprep.subr.mxu0 0.0
      %289 = vmatpush1.msra.mxu0 0.0
      %290 = vmatprep.subr.mxu0 0.0
      %291 = vmatpush1.msra.mxu0 0.0
      %292 = vmatprep.subr.mxu0 0.0
      %293 = vmatpush1.msra.mxu0 0.0
      %294 = vmatprep.subr.mxu0 0.0
      %295 = vmatpush1.msra.mxu0 0.0
      %296 = vmatprep.subr.mxu0 0.0
      %297 = vmatpush1.msra.mxu0 0.0
      %298 = vmatprep.subr.mxu0 0.0
      %299 = vmatpush1.msra.mxu0 0.0
      %300 = vmatprep.subr.mxu0 0.0
      %301 = vmatpush1.msra.mxu0 0.0
      %302 = vmatprep.subr.mxu0 0.0
      %303 = vmatpush1.msra.mxu0 0.0
      %304 = vmatprep.subr.mxu0 0.0
      %305 = vmatpush1.msra.mxu0 0.0
      %306 = vmatprep.subr.mxu0 0.0
      %307 = vmatpush1.msra.mxu0 0.0
      %308 = vmatprep.subr.mxu0 0.0
      %309 = vmatpush1.msra.mxu0 0.0
      %310 = vmatprep.subr.mxu0 0.0
      %311 = vmatpush1.msra.mxu0 0.0
      %312 = vmatprep.subr.mxu0 0.0
      %313 = vmatpush1.msra.mxu0 0.0
      %314 = vmatprep.subr.mxu0 0.0
      %315 = vmatpush1.msra.mxu0 0.0
      %316 = vmatprep.subr.mxu0 0.0
      %317 = vmatpush1.msra.mxu0 0.0
      %318 = vmatprep.subr.mxu0 0.0
      %319 = vmatpush1.msra.mxu0 0.0
      %320 = vmatprep.subr.mxu0 0.0
      %321 = vmatpush1.msra.mxu0 0.0
      %322 = vmatprep.subr.mxu0 0.0
      %323 = vmatpush1.msra.mxu0 0.0
      %324 = vmatprep.subr.mxu0 0.0
      %325 = vmatpush1.msra.mxu0 0.0
      %326 = vmatprep.subr.mxu0 0.0
      %327 = vmatpush1.msra.mxu0 0.0
      %328 = vmatprep.subr.mxu0 0.0
      %329 = vmatpush1.msra.mxu0 0.0
      %330 = vmatprep.subr.mxu0 0.0
      %331 = vmatpush1.msra.mxu0 0.0
      %332 = vmatprep.subr.mxu0 0.0
      %333 = vmatpush1.msra.mxu0 0.0
      %334 = vmatprep.subr.mxu0 0.0
      %335 = vmatpush1.msra.mxu0 0.0
      %336 = vmatprep.subr.mxu0 0.0
      %337 = vmatpush1.msra.mxu0 0.0
      %338 = vmatprep.subr.mxu0 0.0
      %339 = vmatpush1.msra.mxu0 0.0
      %340 = vmatprep.subr.mxu0 0.0
      %341 = vmatpush1.msra.mxu0 0.0
      %342 = vmatprep.mubr.f32.mxu0 0.0
      %343 = vmatmul.mubr.f32.gmra.mrb[0].mxu0 %v276
      %v344 = vpop.f32.mrb[0].mxu0
      %v345 = vadd.f32 %v272, %v344
      %v346 = vpop.f32.mrb[0].mxu0
      %347 = vdwg.mxu0
      %v348 = vld [vmem:[%s3] sm:$0x1]
      %v350 = vlaneseq
      %v351 = vshrl.u32 %v350, 7
      %v352 = vsub.s32 0, %v351
      %v353 = vrot.slane %v348, %v352
      %v355 = vadd.f32 %v345, %v353
      %vm356 = vcmask 64512
      %357 = vst.msk [vmem:[%s192] sm:$0xff] %vm356, %v355
      %p358 = scmp.lt.s32.totalorder %s15, 2
      %s359 = scalar_select %p358, %s15, 2
      %s360 = smul.addr %s359, 8
      %s361 = scalar_lea.vmem %s4, %s360
      // Predicated region
      $region37: #{tpu_custom_call.1} parent=35 // pred_check
        %p362 = pneg %p122
      $region38: #{tpu_custom_call.1} parent=35 // pred_check_branch
        %364 = sbr.rel (%p362) target = $region40
      $region39: #{tpu_custom_call.1} parent=35 // pred_region
        _
      $region40: #{tpu_custom_call.1} parent=35 // pred_fallthru
        _
    $region36: #{tpu_custom_call.1} parent=5 // pred_fallthru
      _
    %p365 = scmp.le.s32.totalorder 2, %s10
    // Predicated region
    $region41: #{tpu_custom_call.1} parent=5 // pred_check
      %p366 = pneg %p365
    $region42: #{tpu_custom_call.1} parent=5 // pred_check_branch
      %368 = sbr.rel (%p366) target = $region44
    $region43: #{tpu_custom_call.1} parent=5 // pred_region
      %s369 = ssub.s32 %s10, 2
      // Predicated region
      $region45: #{tpu_custom_call.1} parent=43 // pred_check
        %p370 = pneg %p128
      $region46: #{tpu_custom_call.1} parent=43 // pred_check_branch
        %372 = sbr.rel (%p370) target = $region48
      $region47: #{tpu_custom_call.1} parent=43 // pred_region
        %p373 = scmp.lt.s32.totalorder %s16, 2
        %s374 = scalar_select %p373, %s16, 2
        %s375 = smul.addr %s374, 8
        %s376 = scalar_lea.vmem %s4, %s375
      $region48: #{tpu_custom_call.1} parent=43 // pred_fallthru
        _
    $region44: #{tpu_custom_call.1} parent=5 // pred_fallthru
      _
  $region6: #{tpu_custom_call.1} parent=0 // loop_footer
    %s14 = sadd.s32 1, %s10
  $region7: #{tpu_custom_call.1} parent=0 // loop_footer_branch
    %9 = sbr.rel target = $region3
  $region8: #{tpu_custom_call.1} parent=0 // loop_exit
    _

</llo_original>
